<compile_context>
chip_gen: v7x
topology: tpu7x:2x2x1
jax: 0.10.0
libtpu: 0.0.40
codegen_flags: <defaults>
</compile_context>

<pallas_src>
import functools

import jax
import jax.numpy as jnp
from jax import lax
from jax.experimental import pallas as pl
from jax.experimental.pallas import tpu as pltpu


def _vmem_capacity_bytes() -> int:
    """Best-effort VMEM capacity query; conservative (v7x, 64 MiB) fallback."""
    try:
        return int(pltpu.get_tpu_info().vmem_capacity_bytes)
    except Exception:
        return 64 * 1024 * 1024


def _pick_tile_h(h: int, bytes_per_row: int, budget: int, align: int) -> int:
    """Largest row-tile (multiple of `align`, dividing H) fitting the VMEM budget."""
    if h % align != 0:
        # TODO(synk): odd-height frames fall back to one full-H tile with no VMEM
        # guard; pad H (plus row masking) if such inputs ever get large.
        return h
    max_th = (budget // max(bytes_per_row, 1)) // align * align
    max_th = max(align, min(h, max_th))
    if max_th >= h:
        return h
    for cand in range(max_th, align - 1, -align):
        if h % cand == 0:
            return cand
    return align


def _make_kernel(edge_weight: float, th: int, wp: int, w_valid: int, nt: int,
                 acc_r: int, img_dtype):
    coef = -float(edge_weight) / 3.0   # folds the 3-channel mean into the exponent
    pad = wp != w_valid
    n_groups = th // 8 if acc_r == 8 else 1
    upcast = img_dtype != jnp.float32

    def _fold(x):
        # (th, wp) -> (acc_r, wp) partial sums via vreg-aligned slice adds (VPU only).
        if acc_r == 8:
            r = x[0:8, :]
            for k in range(1, n_groups):
                r = r + x[8 * k:8 * (k + 1), :]
            return r
        return jnp.sum(x, axis=0, keepdims=True)

    def _fold_skip_row0(x):
        # Same, but zeroes row 0 (the roll wrap-around row of the y-gradient); the
        # select touches only the first (8, wp) group, not the full tile.
        if acc_r == 8:
            row8 = lax.broadcasted_iota(jnp.int32, (8, wp), 0)
            r = jnp.where(row8 == 0, 0.0, x[0:8, :])
            for k in range(1, n_groups):
                r = r + x[8 * k:8 * (k + 1), :]
            return r
        rows = lax.broadcasted_iota(jnp.int32, (th, wp), 0)
        return jnp.sum(jnp.where(rows == 0, 0.0, x), axis=0, keepdims=True)

    def kernel(disp_ref, img_ref, outx_ref, outy_ref, prev_d_ref, prev_img_ref):
        t = pl.program_id(1)

        @pl.when(t == 0)
        def _init():
            outx_ref[...] = jnp.zeros_like(outx_ref)
            outy_ref[...] = jnp.zeros_like(outy_ref)

        d = disp_ref[...]                                     # (th, wp) f32

        # Adjacency mask from a direct compare (no iota roll): with pltpu.roll(x, 1)
        # position j holds x[j-1], so only j==0 is the wrap; padded lanes excluded too.
        col = lax.broadcasted_iota(jnp.int32, (th, wp), 1)
        if pad:
            mask_x = (col >= 1) & (col < w_valid)
        else:
            mask_x = col >= 1

        # Mask applied once to the disparity gradient (not to the full product).
        ddx = jnp.where(mask_x, jnp.abs(d - pltpu.roll(d, 1, axis=1)), 0.0)
        ddy = jnp.abs(d - pltpu.roll(d, 1, axis=0))           # row 0 fixed in the fold

        igx = None
        igy = None
        for c in range(3):                                    # one channel load at a time
            ch = img_ref[c]
            if upcast:
                ch = ch.astype(jnp.float32)
            gx = jnp.abs(ch - pltpu.roll(ch, 1, axis=1))
            gy = jnp.abs(ch - pltpu.roll(ch, 1, axis=0))
            igx = gx if igx is None else igx + gx
            igy = gy if igy is None else igy + gy

        outx_ref[...] += _fold(ddx * jnp.exp(coef * igx))
        outy_ref[...] += _fold_skip_row0(ddy * jnp.exp(coef * igy))

        if nt > 1:
            # y-gradient term for the row pair straddling two row tiles.
            @pl.when(t > 0)
            def _boundary():
                bdy = jnp.abs(prev_d_ref[...] - disp_ref[0:1, :])     # (1, wp)
                big = None
                for c in range(3):
                    a = prev_img_ref[c]
                    b = img_ref[c, 0:1, :]
                    if upcast:
                        a = a.astype(jnp.float32)
                        b = b.astype(jnp.float32)
                    diff = jnp.abs(a - b)
                    big = diff if big is None else big + diff
                outy_ref[0:1, :] += bdy * jnp.exp(coef * big)

            # Carry this tile's last rows for the next tile's boundary term.
            prev_d_ref[...] = disp_ref[th - 1:th, :]
            prev_img_ref[...] = img_ref[:, th - 1:th, :]

    return kernel


@functools.partial(
    jax.jit, static_argnames=("edge_weight", "tile_h", "stream_image_bf16"))
def disparity_smoothness(disparity, image, edge_weight=10.0, tile_h=None,
                         stream_image_bf16=False):
    """Pallas TPU implementation of DisparitySmoothness.forward."""
    B, cd, H, W = disparity.shape
    Bi, ci, Hi, Wi = image.shape
    assert cd == 1 and ci == 3 and (Bi, Hi, Wi) == (B, H, W)

    disparity = disparity.astype(jnp.float32)
    img_dtype = jnp.bfloat16 if stream_image_bf16 else jnp.float32
    image = image.astype(img_dtype)

    # Lane-dense padding of W to a multiple of 128 (keeps vld/vst unmasked).
    Wp = W
    if W > 128 and W % 128 != 0:
        Wp = ((W + 127) // 128) * 128
        disparity = jnp.pad(disparity, ((0, 0), (0, 0), (0, 0), (0, Wp - W)))
        image = jnp.pad(image, ((0, 0), (0, 0), (0, 0), (0, Wp - W)))

    # Generation-aware tile budget / VMEM limit.
    cap = _vmem_capacity_bytes()
    if cap >= 96 * 1024 * 1024:      # 128 MiB parts (v5e / v6e): go big
        step_budget, vmem_limit = 48 * 1024 * 1024, 96 * 1024 * 1024
    else:                            # 64 MiB (v7x) or unknown: stay conservative
        step_budget, vmem_limit = 16 * 1024 * 1024, 48 * 1024 * 1024

    isize = 2 if stream_image_bf16 else 4
    align = 16 if stream_image_bf16 else 8
    # double-buffered inputs (disp f32 + 3ch image) + ~12 live f32 (th,Wp) temporaries
    bytes_per_row = (2 * (4 + 3 * isize) + 48) * Wp

    th = _pick_tile_h(H, bytes_per_row, step_budget, align) if tile_h is None \
        else int(tile_h)
    assert H % th == 0, (H, th)
    assert th == H or th % align == 0, (th, align)
    nt = H // th
    acc_r = 8 if th % 8 == 0 else 1

    kernel = _make_kernel(float(edge_weight), th, Wp, W, nt, acc_r, img_dtype)

    acc_x, acc_y = pl.pallas_call(
        kernel,
        out_shape=(
            jax.ShapeDtypeStruct((B, acc_r, Wp), jnp.float32),
            jax.ShapeDtypeStruct((B, acc_r, Wp), jnp.float32),
        ),
        grid_spec=pltpu.PrefetchScalarGridSpec(
            num_scalar_prefetch=0,
            grid=(B, nt),
            in_specs=[
                pl.BlockSpec((None, None, th, Wp), lambda b, t: (b, 0, t, 0)),
                pl.BlockSpec((None, 3, th, Wp), lambda b, t: (b, 0, t, 0)),
            ],
            out_specs=[
                pl.BlockSpec((None, acc_r, Wp), lambda b, t: (b, 0, 0)),
                pl.BlockSpec((None, acc_r, Wp), lambda b, t: (b, 0, 0)),
            ],
            scratch_shapes=[
                pltpu.VMEM((1, Wp), jnp.float32),   # previous tile's last disparity row
                pltpu.VMEM((3, 1, Wp), img_dtype),  # previous tile's last image rows
            ],
        ),
        compiler_params=pltpu.CompilerParams(
            dimension_semantics=("parallel", "arbitrary"),
            vmem_limit_bytes=vmem_limit,
        ),
    )(disparity, image)

    n_x = B * H * (W - 1)
    n_y = B * (H - 1) * W
    return jnp.sum(acc_x) / n_x + jnp.sum(acc_y) / n_y


def _reference(disparity, image, edge_weight=10.0):
    dgx = jnp.abs(disparity[:, :, :, :-1] - disparity[:, :, :, 1:])
    dgy = jnp.abs(disparity[:, :, :-1, :] - disparity[:, :, 1:, :])
    igx = jnp.mean(jnp.abs(image[:, :, :, :-1] - image[:, :, :, 1:]), 1, keepdims=True)
    igy = jnp.mean(jnp.abs(image[:, :, :-1, :] - image[:, :, 1:, :]), 1, keepdims=True)
    wx = jnp.exp(-edge_weight * igx)
    wy = jnp.exp(-edge_weight * igy)
    return jnp.mean(dgx * wx) + jnp.mean(dgy * wy)


if __name__ == "__main__":
    key = jax.random.PRNGKey(0)
    k1, k2, k3, k4 = jax.random.split(key, 4)

    # Primary small case (single row tile, W < 128).
    B, H, W = 2, 16, 16
    disp = jax.random.uniform(k1, (B, 1, H, W), dtype=jnp.float32)
    img = jax.random.uniform(k2, (B, 3, H, W), dtype=jnp.float32)
    loss = jax.block_until_ready(disparity_smoothness(disp, img, edge_weight=10.0))
    ref = _reference(disp, img, 10.0)
    assert jnp.allclose(loss, ref, rtol=2e-5, atol=1e-6), (loss, ref)

    # Tiled case exercising the row-tile carry (H=32 split into 4 tiles of 8 rows).
    B2, H2, W2 = 2, 32, 128
    disp2 = jax.random.uniform(k3, (B2, 1, H2, W2), dtype=jnp.float32)
    img2 = jax.random.uniform(k4, (B2, 3, H2, W2), dtype=jnp.float32)
    loss2 = jax.block_until_ready(
        disparity_smoothness(disp2, img2, edge_weight=10.0, tile_h=8))
    ref2 = _reference(disp2, img2, 10.0)
    assert jnp.allclose(loss2, ref2, rtol=2e-5, atol=1e-6), (loss2, ref2)

    # bf16 image streaming (HBM-bandwidth win on v5e/v6e); compare against the f32
    # reference evaluated on the bf16-rounded image (compute stays f32 in-kernel).
    loss3 = jax.block_until_ready(
        disparity_smoothness(disp2, img2, edge_weight=10.0, tile_h=16,
                             stream_image_bf16=True))
    ref3 = _reference(disp2, img2.astype(jnp.bfloat16).astype(jnp.float32), 10.0)
    assert jnp.allclose(loss3, ref3, rtol=2e-4, atol=1e-5), (loss3, ref3)

    print("KERNEL_OK")
</pallas_src>

<mosaic_0001>
module attributes {stable_mosaic.version = 11 : i64} {
  func.func @kernel(%arg0: i32, %arg1: i32, %arg2: memref<1x1x16x16xf32, #tpu.memory_space<vmem>>, %arg3: memref<1x3x16x16xf32, #tpu.memory_space<vmem>>, %arg4: memref<1x8x16xf32, #tpu.memory_space<vmem>>, %arg5: memref<1x8x16xf32, #tpu.memory_space<vmem>>, %arg6: memref<1x16xf32, #tpu.memory_space<vmem>>, %arg7: memref<3x1x16xf32, #tpu.memory_space<vmem>>) attributes {dimension_semantics = [#tpu.dimension_semantics<parallel>, #tpu.dimension_semantics<arbitrary>], iteration_bounds = array<i64: 2, 1>, scalar_prefetch = 0 : i64, scratch_operands = 2 : i64, tpu.core_type = #tpu.core_type<tc>, window_params = [{transform_indices = @transform_0, window_bounds = array<i64: 1, 1, 16, 16>}, {transform_indices = @transform_1, window_bounds = array<i64: 1, 3, 16, 16>}, {transform_indices = @transform_2, window_bounds = array<i64: 1, 8, 16>}, {transform_indices = @transform_3, window_bounds = array<i64: 1, 8, 16>}]} {
    %c0_i32 = arith.constant 0 : i32
    %0 = arith.cmpi eq, %arg1, %c0_i32 : i32
    %1 = arith.extui %0 : i1 to i32
    %c0_i32_0 = arith.constant 0 : i32
    %2 = arith.cmpi ne, %1, %c0_i32_0 : i32
    scf.if %2 {
      %cst_38 = arith.constant 0.000000e+00 : f32
      %75 = vector.broadcast %cst_38 : f32 to vector<8x16xf32>
      %c0_39 = arith.constant 0 : index
      %c0_40 = arith.constant 0 : index
      %c0_41 = arith.constant 0 : index
      %76 = vector.load %arg4[%c0_39, %c0_40, %c0_41] : memref<1x8x16xf32, #tpu.memory_space<vmem>>, vector<1x8x16xf32>
      %77 = vector.shape_cast %76 : vector<1x8x16xf32> to vector<8x16xf32>
      %78 = vector.shape_cast %75 : vector<8x16xf32> to vector<1x8x16xf32>
      tpu.vector_store %arg4[%c0_39, %c0_40, %c0_41], %78 {strides = array<i32>} : memref<1x8x16xf32, #tpu.memory_space<vmem>>, vector<1x8x16xf32>,
      %cst_42 = arith.constant 0.000000e+00 : f32
      %79 = vector.broadcast %cst_42 : f32 to vector<8x16xf32>
      %c0_43 = arith.constant 0 : index
      %c0_44 = arith.constant 0 : index
      %c0_45 = arith.constant 0 : index
      %80 = vector.load %arg5[%c0_43, %c0_44, %c0_45] : memref<1x8x16xf32, #tpu.memory_space<vmem>>, vector<1x8x16xf32>
      %81 = vector.shape_cast %80 : vector<1x8x16xf32> to vector<8x16xf32>
      %82 = vector.shape_cast %79 : vector<8x16xf32> to vector<1x8x16xf32>
      tpu.vector_store %arg5[%c0_43, %c0_44, %c0_45], %82 {strides = array<i32>} : memref<1x8x16xf32, #tpu.memory_space<vmem>>, vector<1x8x16xf32>,
    } else {
    }
    %c0 = arith.constant 0 : index
    %c0_1 = arith.constant 0 : index
    %c0_2 = arith.constant 0 : index
    %c0_3 = arith.constant 0 : index
    %3 = vector.load %arg2[%c0, %c0_1, %c0_2, %c0_3] : memref<1x1x16x16xf32, #tpu.memory_space<vmem>>, vector<1x1x16x16xf32>
    %4 = vector.shape_cast %3 : vector<1x1x16x16xf32> to vector<16x16xf32>
    %5 = tpu.iota {dimensions = array<i32: 1>} : vector<16x16xi32>
    %c1_i32 = arith.constant 1 : i32
    %6 = vector.broadcast %c1_i32 : i32 to vector<16x16xi32>
    %7 = arith.cmpi sge, %5, %6 : vector<16x16xi32>
    %c1_i32_4 = arith.constant 1 : i32
    %8 = tpu.dynamic_rotate %4 by %c1_i32_4 dim 1 : vector<16x16xf32>, i32 -> vector<16x16xf32>
    %9 = arith.subf %4, %8 : vector<16x16xf32>
    %10 = math.absf %9 : vector<16x16xf32>
    %cst = arith.constant 0.000000e+00 : f32
    %11 = vector.broadcast %cst : f32 to vector<16x16xf32>
    %12 = arith.select %7, %10, %11 : vector<16x16xi1>, vector<16x16xf32>
    %c1_i32_5 = arith.constant 1 : i32
    %13 = tpu.dynamic_rotate %4 by %c1_i32_5 dim 0 : vector<16x16xf32>, i32 -> vector<16x16xf32>
    %14 = arith.subf %4, %13 : vector<16x16xf32>
    %15 = math.absf %14 : vector<16x16xf32>
    %c0_6 = arith.constant 0 : index
    %c0_7 = arith.constant 0 : index
    %c0_8 = arith.constant 0 : index
    %c0_9 = arith.constant 0 : index
    %16 = vector.load %arg3[%c0_6, %c0_7, %c0_8, %c0_9] : memref<1x3x16x16xf32, #tpu.memory_space<vmem>>, vector<1x1x16x16xf32>
    %17 = vector.shape_cast %16 : vector<1x1x16x16xf32> to vector<16x16xf32>
    %c1_i32_10 = arith.constant 1 : i32
    %18 = tpu.dynamic_rotate %17 by %c1_i32_10 dim 1 : vector<16x16xf32>, i32 -> vector<16x16xf32>
    %19 = arith.subf %17, %18 : vector<16x16xf32>
    %20 = math.absf %19 : vector<16x16xf32>
    %c1_i32_11 = arith.constant 1 : i32
    %21 = tpu.dynamic_rotate %17 by %c1_i32_11 dim 0 : vector<16x16xf32>, i32 -> vector<16x16xf32>
    %22 = arith.subf %17, %21 : vector<16x16xf32>
    %23 = math.absf %22 : vector<16x16xf32>
    %c0_12 = arith.constant 0 : index
    %c1 = arith.constant 1 : index
    %c0_13 = arith.constant 0 : index
    %c0_14 = arith.constant 0 : index
    %24 = vector.load %arg3[%c0_12, %c1, %c0_13, %c0_14] : memref<1x3x16x16xf32, #tpu.memory_space<vmem>>, vector<1x1x16x16xf32>
    %25 = vector.shape_cast %24 : vector<1x1x16x16xf32> to vector<16x16xf32>
    %c1_i32_15 = arith.constant 1 : i32
    %26 = tpu.dynamic_rotate %25 by %c1_i32_15 dim 1 : vector<16x16xf32>, i32 -> vector<16x16xf32>
    %27 = arith.subf %25, %26 : vector<16x16xf32>
    %28 = math.absf %27 : vector<16x16xf32>
    %c1_i32_16 = arith.constant 1 : i32
    %29 = tpu.dynamic_rotate %25 by %c1_i32_16 dim 0 : vector<16x16xf32>, i32 -> vector<16x16xf32>
    %30 = arith.subf %25, %29 : vector<16x16xf32>
    %31 = math.absf %30 : vector<16x16xf32>
    %32 = arith.addf %20, %28 : vector<16x16xf32>
    %33 = arith.addf %23, %31 : vector<16x16xf32>
    %c0_17 = arith.constant 0 : index
    %c2 = arith.constant 2 : index
    %c0_18 = arith.constant 0 : index
    %c0_19 = arith.constant 0 : index
    %34 = vector.load %arg3[%c0_17, %c2, %c0_18, %c0_19] : memref<1x3x16x16xf32, #tpu.memory_space<vmem>>, vector<1x1x16x16xf32>
    %35 = vector.shape_cast %34 : vector<1x1x16x16xf32> to vector<16x16xf32>
    %c1_i32_20 = arith.constant 1 : i32
    %36 = tpu.dynamic_rotate %35 by %c1_i32_20 dim 1 : vector<16x16xf32>, i32 -> vector<16x16xf32>
    %37 = arith.subf %35, %36 : vector<16x16xf32>
    %38 = math.absf %37 : vector<16x16xf32>
    %c1_i32_21 = arith.constant 1 : i32
    %39 = tpu.dynamic_rotate %35 by %c1_i32_21 dim 0 : vector<16x16xf32>, i32 -> vector<16x16xf32>
    %40 = arith.subf %35, %39 : vector<16x16xf32>
    %41 = math.absf %40 : vector<16x16xf32>
    %42 = arith.addf %32, %38 : vector<16x16xf32>
    %43 = arith.addf %33, %41 : vector<16x16xf32>
    %c0_22 = arith.constant 0 : index
    %c0_23 = arith.constant 0 : index
    %c0_24 = arith.constant 0 : index
    %44 = vector.load %arg4[%c0_22, %c0_23, %c0_24] : memref<1x8x16xf32, #tpu.memory_space<vmem>>, vector<1x8x16xf32>
    %45 = vector.shape_cast %44 : vector<1x8x16xf32> to vector<8x16xf32>
    %cst_25 = arith.constant -3.33333325 : f32
    %46 = vector.broadcast %cst_25 : f32 to vector<16x16xf32>
    %47 = arith.mulf %46, %42 : vector<16x16xf32>
    %48 = math.exp %47 : vector<16x16xf32>
    %49 = arith.mulf %12, %48 : vector<16x16xf32>
    %50 = vector.extract_strided_slice %49 {offsets = [0, 0], sizes = [8, 16], strides = [1, 1]} : vector<16x16xf32> to vector<8x16xf32>
    %51 = vector.extract_strided_slice %49 {offsets = [8, 0], sizes = [8, 16], strides = [1, 1]} : vector<16x16xf32> to vector<8x16xf32>
    %52 = arith.addf %50, %51 : vector<8x16xf32>
    %53 = arith.addf %45, %52 : vector<8x16xf32>
    %c0_26 = arith.constant 0 : index
    %c0_27 = arith.constant 0 : index
    %c0_28 = arith.constant 0 : index
    %54 = vector.load %arg4[%c0_26, %c0_27, %c0_28] : memref<1x8x16xf32, #tpu.memory_space<vmem>>, vector<1x8x16xf32>
    %55 = vector.shape_cast %54 : vector<1x8x16xf32> to vector<8x16xf32>
    %56 = vector.shape_cast %53 : vector<8x16xf32> to vector<1x8x16xf32>
    tpu.vector_store %arg4[%c0_26, %c0_27, %c0_28], %56 {strides = array<i32>} : memref<1x8x16xf32, #tpu.memory_space<vmem>>, vector<1x8x16xf32>,
    %c0_29 = arith.constant 0 : index
    %c0_30 = arith.constant 0 : index
    %c0_31 = arith.constant 0 : index
    %57 = vector.load %arg5[%c0_29, %c0_30, %c0_31] : memref<1x8x16xf32, #tpu.memory_space<vmem>>, vector<1x8x16xf32>
    %58 = vector.shape_cast %57 : vector<1x8x16xf32> to vector<8x16xf32>
    %cst_32 = arith.constant -3.33333325 : f32
    %59 = vector.broadcast %cst_32 : f32 to vector<16x16xf32>
    %60 = arith.mulf %59, %43 : vector<16x16xf32>
    %61 = math.exp %60 : vector<16x16xf32>
    %62 = arith.mulf %15, %61 : vector<16x16xf32>
    %63 = tpu.iota {dimensions = array<i32: 0>} : vector<8x16xi32>
    %c0_i32_33 = arith.constant 0 : i32
    %64 = vector.broadcast %c0_i32_33 : i32 to vector<8x16xi32>
    %65 = arith.cmpi eq, %63, %64 : vector<8x16xi32>
    %66 = vector.extract_strided_slice %62 {offsets = [0, 0], sizes = [8, 16], strides = [1, 1]} : vector<16x16xf32> to vector<8x16xf32>
    %cst_34 = arith.constant 0.000000e+00 : f32
    %67 = vector.broadcast %cst_34 : f32 to vector<8x16xf32>
    %68 = arith.select %65, %67, %66 : vector<8x16xi1>, vector<8x16xf32>
    %69 = vector.extract_strided_slice %62 {offsets = [8, 0], sizes = [8, 16], strides = [1, 1]} : vector<16x16xf32> to vector<8x16xf32>
    %70 = arith.addf %68, %69 : vector<8x16xf32>
    %71 = arith.addf %58, %70 : vector<8x16xf32>
    %c0_35 = arith.constant 0 : index
    %c0_36 = arith.constant 0 : index
    %c0_37 = arith.constant 0 : index
    %72 = vector.load %arg5[%c0_35, %c0_36, %c0_37] : memref<1x8x16xf32, #tpu.memory_space<vmem>>, vector<1x8x16xf32>
    %73 = vector.shape_cast %72 : vector<1x8x16xf32> to vector<8x16xf32>
    %74 = vector.shape_cast %71 : vector<8x16xf32> to vector<1x8x16xf32>
    tpu.vector_store %arg5[%c0_35, %c0_36, %c0_37], %74 {strides = array<i32>} : memref<1x8x16xf32, #tpu.memory_space<vmem>>, vector<1x8x16xf32>,
    return
  }
  func.func @transform_0(%arg0: i32, %arg1: i32) -> (i32, i32, i32, i32) {
    %c0_i32 = arith.constant 0 : i32
    %c0_i32_0 = arith.constant 0 : i32
    %c0_i32_1 = arith.constant 0 : i32
    return %arg0, %c0_i32, %arg1, %c0_i32_0 : i32, i32, i32, i32
  }
  func.func @transform_1(%arg0: i32, %arg1: i32) -> (i32, i32, i32, i32) {
    %c0_i32 = arith.constant 0 : i32
    %c0_i32_0 = arith.constant 0 : i32
    %c0_i32_1 = arith.constant 0 : i32
    return %arg0, %c0_i32, %arg1, %c0_i32_0 : i32, i32, i32, i32
  }
  func.func @transform_2(%arg0: i32, %arg1: i32) -> (i32, i32, i32) {
    %c0_i32 = arith.constant 0 : i32
    %c0_i32_0 = arith.constant 0 : i32
    %c0_i32_1 = arith.constant 0 : i32
    return %arg0, %c0_i32, %c0_i32_0 : i32, i32, i32
  }
  func.func @transform_3(%arg0: i32, %arg1: i32) -> (i32, i32, i32) {
    %c0_i32 = arith.constant 0 : i32
    %c0_i32_0 = arith.constant 0 : i32
    %c0_i32_1 = arith.constant 0 : i32
    return %arg0, %c0_i32, %c0_i32_0 : i32, i32, i32
  }
}

</mosaic_0001>

<llo_original>
// kernel: disparity_smoothness.1
$region0: #{disparity_smoothness.1}
  #allocation0 [shape = 'u32[]', space=smem, size = 0x4, offset = 0x4, fixed_abs, tag = 'smem constant byte address 0x4 - core index']
  #allocation1 [shape = 'u32[144,128]{1,0:T(1,128)}', space=vmem, size = 0x12000, scoped, tag = 'internal scratch']
  #allocation2 [shape = 'f32[1,16]{1,0:T(1,128)}', space=vmem, size = 0x200, scoped, tag = 'scratch operand']
  #allocation3 [shape = 'f32[3,1,16]{2,1,0:T(1,128)}', space=vmem, size = 0x600, scoped, tag = 'scratch operand']
  %s0 = inlined_call_operand.hbm [shape: f32[2,1,16,16], index: 0, kind: input, shape index: {}]
  %s1 = inlined_call_operand.hbm [shape: f32[2,3,16,16], index: 1, kind: input, shape index: {}]
  %s2 = inlined_call_operand.vmem [shape: f32[2,8,16], index: 2, kind: output, shape index: {0}]
  %s3 = inlined_call_operand.vmem [shape: f32[2,8,16], index: 3, kind: output, shape index: {1}]
  %4 = xla_tuple %s2, %s3
  %s5 = sld [smem:[#allocation0]]
  $region61: #{disparity_smoothness.1} parent=0
    _
  %s7 = ssub.s32 1, %s5
  %s8 = scalar_select 0, %s7, %s5
  $region1: #{disparity_smoothness.1} parent=0
    #allocation4 [shape = 'u8[16384]{0}', space=vmem, size = 0x4000, scoped, tag = 'input window, operand 0']
    #allocation5 [shape = 's32[2]{0}', space=sflag, size = 0x8, scoped, tag = 'scoped memory for disparity_smoothness.1']
    #allocation6 [shape = 'u8[49152]{0}', space=vmem, size = 0xc000, scoped, tag = 'input window, operand 1']
    #allocation7 [shape = 's32[2]{0}', space=sflag, size = 0x8, scoped, tag = 'scoped memory for disparity_smoothness.1']
    %9 = vsyncpa [#allocation5], 0
    %s10 = scalar_lea.sflag [#allocation5], 1
    %11 = vsyncpa %s10, 0
    %12 = vsyncpa [#allocation7], 0
    %s13 = scalar_lea.sflag [#allocation7], 1
    %14 = vsyncpa %s13, 0
    loop: start=0, step=1, limit=4
    $region2: #{disparity_smoothness.1} parent=1 // loop_pre_header
      _
    $region3: #{disparity_smoothness.1} parent=1 // loop_header
      %s16 = sphi 0, %s20
      %p17 = scmp.ge.s32.totalorder %s16, 4
      %s23 = sphi 0, %s35
      %s24 = sphi 0, %s31
      %s25 = sphi 0, %s23
      %s26 = sphi 0, %s24
      %s27 = sphi 0, %s25
      %s28 = sphi 0, %s26
      %s40 = sphi 0, %s42
      %s43 = sphi 0, %s40
      %s44 = sphi 0, %s43
      %s60 = sphi 0, %s44
      %s68 = sphi 0, %s70
      %s71 = sphi 0, %s68
      %s72 = sphi 0, %s71
      %s88 = sphi 0, %s72
      %s94 = sphi 0, %s96
      %s97 = sphi 0, %s94
      %s98 = sphi 0, %s97
      %s114 = sphi 0, %s98
      %s120 = sphi 0, %s122
      %s123 = sphi 0, %s120
      %s124 = sphi 0, %s123
      %s140 = sphi 0, %s124
    $region4: #{disparity_smoothness.1} parent=1 // loop_header_branch
      %19 = sbr.rel (%p17) target = $region8
    $region5: #{disparity_smoothness.1} parent=1 // loop_body
      %s21 = ssub.s32 %s16, 1
      %s22 = ssub.s32 %s16, 2
      %s29 = sadd.s32 1, %s24
      %p30 = scmp.ge.s32.totalorder %s29, 1
      %s31 = scalar_select %p30, 0, %s29
      %s32 = sadd.s32 1, %s23
      %s33 = scalar_select %p30, %s32, %s23
      %p34 = scmp.ge.s32.totalorder %s33, 2
      %s35 = scalar_select %p34, 0, %s33
      %s36 = ssub.s32 %s23, %s35
      %s37 = ssub.s32 %s24, %s31
      %s38 = sor.u32 %s36, %s37
      %p39 = scmp.eq.s32.totalorder %s38, 0
      %s41 = sadd.s32 %s40, 1
      %s42 = scalar_select %p39, %s40, %s41
      %p45 = pneg %p39
      %p46 = scmp.eq.s32.totalorder %s16, 1
      %p47 = por %p45, %p46
      %p48 = scmp.ne.s32.totalorder %s40, %s43
      %p49 = scmp.eq.s32.totalorder %s16, 0
      %p50 = por %p48, %p49
      %p51 = scmp.ne.s32.totalorder %s40, %s43
      %p52 = scmp.eq.s32.totalorder %s21, 1
      %p53 = por %p51, %p52
      %p54 = scmp.ne.s32.totalorder %s43, %s44
      %p55 = scmp.eq.s32.totalorder %s21, 0
      %p56 = por %p54, %p55
      %p57 = scmp.ne.s32.totalorder %s43, %s44
      %p58 = scmp.eq.s32.totalorder %s22, 1
      %p59 = por %p57, %p58
      %p61 = scmp.ne.s32.totalorder %s44, %s60
      %p62 = scmp.eq.s32.totalorder %s22, 0
      %p63 = por %p61, %p62
      %s64 = ssub.s32 %s23, %s35
      %s65 = ssub.s32 %s24, %s31
      %s66 = sor.u32 %s64, %s65
      %p67 = scmp.eq.s32.totalorder %s66, 0
      %s69 = sadd.s32 %s68, 1
      %s70 = scalar_select %p67, %s68, %s69
      %p73 = pneg %p67
      %p74 = scmp.eq.s32.totalorder %s16, 1
      %p75 = por %p73, %p74
      %p76 = scmp.ne.s32.totalorder %s68, %s71
      %p77 = scmp.eq.s32.totalorder %s16, 0
      %p78 = por %p76, %p77
      %p79 = scmp.ne.s32.totalorder %s68, %s71
      %p80 = scmp.eq.s32.totalorder %s21, 1
      %p81 = por %p79, %p80
      %p82 = scmp.ne.s32.totalorder %s71, %s72
      %p83 = scmp.eq.s32.totalorder %s21, 0
      %p84 = por %p82, %p83
      %p85 = scmp.ne.s32.totalorder %s71, %s72
      %p86 = scmp.eq.s32.totalorder %s22, 1
      %p87 = por %p85, %p86
      %p89 = scmp.ne.s32.totalorder %s72, %s88
      %p90 = scmp.eq.s32.totalorder %s22, 0
      %p91 = por %p89, %p90
      %s92 = ssub.s32 %s23, %s35
      %p93 = scmp.eq.s32.totalorder %s92, 0
      %s95 = sadd.s32 %s94, 1
      %s96 = scalar_select %p93, %s94, %s95
      %p99 = pneg %p93
      %p100 = scmp.eq.s32.totalorder %s16, 1
      %p101 = por %p99, %p100
      %p102 = scmp.ne.s32.totalorder %s94, %s97
      %p103 = scmp.eq.s32.totalorder %s16, 0
      %p104 = por %p102, %p103
      %p105 = scmp.ne.s32.totalorder %s94, %s97
      %p106 = scmp.eq.s32.totalorder %s21, 1
      %p107 = por %p105, %p106
      %p108 = scmp.ne.s32.totalorder %s97, %s98
      %p109 = scmp.eq.s32.totalorder %s21, 0
      %p110 = por %p108, %p109
      %p111 = scmp.ne.s32.totalorder %s97, %s98
      %p112 = scmp.eq.s32.totalorder %s22, 1
      %p113 = por %p111, %p112
      %p115 = scmp.ne.s32.totalorder %s98, %s114
      %p116 = scmp.eq.s32.totalorder %s22, 0
      %p117 = por %p115, %p116
      %s118 = ssub.s32 %s23, %s35
      %p119 = scmp.eq.s32.totalorder %s118, 0
      %s121 = sadd.s32 %s120, 1
      %s122 = scalar_select %p119, %s120, %s121
      %p125 = pneg %p119
      %p126 = scmp.eq.s32.totalorder %s16, 1
      %p127 = por %p125, %p126
      %p128 = scmp.ne.s32.totalorder %s120, %s123
      %p129 = scmp.eq.s32.totalorder %s16, 0
      %p130 = por %p128, %p129
      %p131 = scmp.ne.s32.totalorder %s120, %s123
      %p132 = scmp.eq.s32.totalorder %s21, 1
      %p133 = por %p131, %p132
      %p134 = scmp.ne.s32.totalorder %s123, %s124
      %p135 = scmp.eq.s32.totalorder %s21, 0
      %p136 = por %p134, %p135
      %p137 = scmp.ne.s32.totalorder %s123, %s124
      %p138 = scmp.eq.s32.totalorder %s22, 1
      %p139 = por %p137, %p138
      %p141 = scmp.ne.s32.totalorder %s124, %s140
      %p142 = scmp.eq.s32.totalorder %s22, 0
      %p143 = por %p141, %p142
      %p144 = scmp.le.s32.totalorder 1, %s16
      %p145 = scmp.lt.s32.totalorder %s16, 3
      %p146 = pnand %p144, %p145
      %p147 = pneg %p146
      // Predicated region
      $region9: #{disparity_smoothness.1} parent=5 // pred_check
        _
      $region10: #{disparity_smoothness.1} parent=5 // pred_check_branch
        %149 = sbr.rel (%p146) target = $region12
      $region11: #{disparity_smoothness.1} parent=5 // pred_region
        %s150 = ssub.s32 %s16, 1
      $region12: #{disparity_smoothness.1} parent=5 // pred_fallthru
        _
      %p151 = scmp.lt.s32.totalorder %s16, 2
      // Predicated region
      $region13: #{disparity_smoothness.1} parent=5 // pred_check
        %p152 = pneg %p151
      $region14: #{disparity_smoothness.1} parent=5 // pred_check_branch
        %154 = sbr.rel (%p152) target = $region16
      $region15: #{disparity_smoothness.1} parent=5 // pred_region
        // Predicated region
        $region17: #{disparity_smoothness.1} parent=15 // pred_check
          %p155 = pneg %p50
        $region18: #{disparity_smoothness.1} parent=15 // pred_check_branch
          %157 = sbr.rel (%p155) target = $region20
        $region19: #{disparity_smoothness.1} parent=15 // pred_region
          %s158 = sand.u32 %s40, 1
          %s159 = scalar_lea.sflag [#allocation5], %s158
          %s160 = sand.u32 %s40, 1
          %s161 = smul.addr %s160, 16
          %s162 = scalar_lea.vmem [#allocation4], %s161
          %s163 = smul.u32 2, %s24
          %s165 = ssub.s32 256, 256
          %166 = vsyncadd %s159, %s165
          %s167 = smul.addr %s23, 2
          %s168 = sadd.s32 %s163, %s167
          %s169 = smul.addr %s168, 128
          %s170 = scalar_lea.hbm %s0, %s169
          %s171 = sshll.u32 %s162, 4
          %s172 = int_to_ptr.vmem [resolvable:$true] %s171
          %177 = dma.hbm_to_vmem [thread:$0]  %s170, 256, %s172, %s159, 128, 128, 8
        $region20: #{disparity_smoothness.1} parent=15 // pred_fallthru
          _
        // Predicated region
        $region21: #{disparity_smoothness.1} parent=15 // pred_check
          %p178 = pneg %p78
        $region22: #{disparity_smoothness.1} parent=15 // pred_check_branch
          %180 = sbr.rel (%p178) target = $region24
        $region23: #{disparity_smoothness.1} parent=15 // pred_region
          %s181 = sand.u32 %s68, 1
          %s182 = scalar_lea.sflag [#allocation7], %s181
          %s183 = sand.u32 %s68, 1
          %s184 = smul.addr %s183, 48
          %s185 = scalar_lea.vmem [#allocation6], %s184
          %s186 = smul.u32 2, %s24
          %s188 = ssub.s32 768, 768
          %189 = vsyncadd %s182, %s188
          %s190 = smul.addr %s23, 6
          %s191 = sadd.s32 %s186, %s190
          %s192 = smul.addr %s191, 128
          %s193 = scalar_lea.hbm %s1, %s192
          %s194 = sshll.u32 %s185, 4
          %s195 = int_to_ptr.vmem [resolvable:$true] %s194
          %200 = dma.hbm_to_vmem [thread:$0]  %s193, 768, %s195, %s182, 128, 128, 8
        $region24: #{disparity_smoothness.1} parent=15 // pred_fallthru
          _
      $region16: #{disparity_smoothness.1} parent=5 // pred_fallthru
        _
      %p201 = scmp.le.s32.totalorder 1, %s16
      %p202 = scmp.lt.s32.totalorder %s16, 3
      %p203 = pnand %p201, %p202
      %p204 = pneg %p203
      // Predicated region
      $region25: #{disparity_smoothness.1} parent=5 // pred_check
        _
      $region26: #{disparity_smoothness.1} parent=5 // pred_check_branch
        %206 = sbr.rel (%p203) target = $region28
      $region27: #{disparity_smoothness.1} parent=5 // pred_region
        %s207 = ssub.s32 %s16, 1
        %s208 = sand.u32 %s43, 1
        %s209 = scalar_lea.sflag [#allocation5], %s208
        %s210 = sand.u32 %s43, 1
        %s211 = smul.addr %s210, 16
        %s212 = scalar_lea.vmem [#allocation4], %s211
        // Predicated region
        $region29: #{disparity_smoothness.1} parent=27 // pred_check
          %p213 = pneg %p56
        $region30: #{disparity_smoothness.1} parent=27 // pred_check_branch
          %215 = sbr.rel (%p213) target = $region32
        $region31: #{disparity_smoothness.1} parent=27 // pred_region
          %216 = dma.done %s209, 256
        $region32: #{disparity_smoothness.1} parent=27 // pred_fallthru
          _
        %s217 = sand.u32 %s71, 1
        %s218 = scalar_lea.sflag [#allocation7], %s217
        %s219 = sand.u32 %s71, 1
        %s220 = smul.addr %s219, 48
        %s221 = scalar_lea.vmem [#allocation6], %s220
        // Predicated region
        $region33: #{disparity_smoothness.1} parent=27 // pred_check
          %p222 = pneg %p84
        $region34: #{disparity_smoothness.1} parent=27 // pred_check_branch
          %224 = sbr.rel (%p222) target = $region36
        $region35: #{disparity_smoothness.1} parent=27 // pred_region
          %225 = dma.done %s218, 768
        $region36: #{disparity_smoothness.1} parent=27 // pred_fallthru
          _
        %s226 = sand.u32 %s43, 1
        %s227 = scalar_lea.sflag [#allocation5], %s226
        %s228 = sand.u32 %s43, 1
        %s229 = smul.addr %s228, 16
        %s230 = scalar_lea.vmem [#allocation4], %s229
        %p231 = pneg %p56
        %p232 = pneg %p53
        %s233 = sand.u32 %s71, 1
        %s234 = scalar_lea.sflag [#allocation7], %s233
        %s235 = sand.u32 %s71, 1
        %s236 = smul.addr %s235, 48
        %s237 = scalar_lea.vmem [#allocation6], %s236
        %p238 = pneg %p84
        %p239 = pneg %p81
        %p240 = pneg %p110
        %p241 = pneg %p107
        %p242 = scmp.lt.s32.totalorder %s25, 1
        %s243 = scalar_select %p242, %s25, 1
        %s244 = smul.addr %s243, 8
        %s245 = scalar_lea.vmem %s2, %s244
        %p246 = pneg %p136
        %p247 = pneg %p133
        %p248 = scmp.lt.s32.totalorder %s25, 1
        %s249 = scalar_select %p248, %s25, 1
        %s250 = smul.addr %s249, 8
        %s251 = scalar_lea.vmem %s3, %s250
        %s252 = smul.u32 2, %s26
        %s253 = smul.u32 2, %s26
        %p254 = scmp.lt.s32.totalorder %s25, 1
        %s255 = scalar_select %p254, %s25, 1
        %s256 = smul.addr %s255, 8
        %s257 = scalar_lea.vmem %s2, %s256
        %p258 = scmp.lt.s32.totalorder %s25, 1
        %s259 = scalar_select %p258, %s25, 1
        %s260 = smul.addr %s259, 8
        %s261 = scalar_lea.vmem %s3, %s260
        %p262 = scmp.eq.s32.totalorder %s26, 0
        // Predicated region
        $region37: #{disparity_smoothness.1} parent=27 // pred_check
          %p263 = pneg %p262
        $region38: #{disparity_smoothness.1} parent=27 // pred_check_branch
          %265 = sbr.rel (%p263) target = $region40
        $region39: #{disparity_smoothness.1} parent=27 // pred_region
          %vm266 = vcmask 130048
          %267 = vst.msk [vmem:[%s257] sm:$0xff] %vm266, 0.0
          %268 = vst.msk [vmem:[%s261] sm:$0xff] %vm266, 0.0
        $region40: #{disparity_smoothness.1} parent=27 // pred_fallthru
          _
        %v269 = vld [vmem:[%s212] sm:$0xff]
        %v270 = vld [vmem:[%s212 + $0x8] sm:$0xff]
        %v271 = vlaneseq
        %v272 = vand.u32 %v271, 127
        %vm273 = vcmp.ge.s32.totalorder %v272, 1
        %vm274 = vcmask 1047680
        %275 = vrot.lane.b32.xlu0 %v269, 16
        %v276 = vpop.permute.xlu0 %275
        %v277 = vsel %vm274, %v276, %v269
        %278 = vrot.lane.b32.xlu0 %v270, 16
        %v279 = vpop.permute.xlu0 %278
        %v280 = vsel %vm274, %v279, %v270
        %281 = vrot.lane.b32.xlu0 %v277, 16
        %v282 = vpop.permute.xlu0 %281
        %283 = vrot.lane.b32.xlu0 %v280, 16
        %v284 = vpop.permute.xlu0 %283
        %v285 = vsel %vm274, %v282, %v269
        %v286 = vsel %vm274, %v284, %v270
        %289 = vrot.lane.b32.xlu0 %v285, 113
        %v290 = vpop.permute.xlu0 %289
        %291 = vrot.lane.b32.xlu0 %v286, 113
        %v292 = vpop.permute.xlu0 %291
        %v295 = vsub.f32 %v269, %v290
        %v296 = vsub.f32 %v270, %v292
        %v297 = vand.u32 2147483647, %v295
        %v298 = vand.u32 2147483647, %v296
        %v299 = vsel %vm273, %v297, 0.0
        %v300 = vsel %vm273, %v298, 0.0
        %v301 = vrot.slane %v269, 7
        %v302 = vrot.slane %v270, 7
        %v303 = vlaneseq
        %v304 = vshrl.u32 %v303, 7
        %vm305 = vcmp.lt.s32.totalorder %v304, 1
        %v306 = vsel %vm305, %v301, %v302
        %v307 = vsel %vm305, %v302, %v301
        %v308 = vsub.f32 %v269, %v307
        %v309 = vsub.f32 %v270, %v306
        %v310 = vand.u32 2147483647, %v308
        %v311 = vand.u32 2147483647, %v309
        %v312 = vld [vmem:[%s221] sm:$0xff]
        %v313 = vld [vmem:[%s221 + $0x8] sm:$0xff]
        %314 = vrot.lane.b32.xlu0 %v312, 16
        %v315 = vpop.permute.xlu0 %314
        %v316 = vsel %vm274, %v315, %v312
        %317 = vrot.lane.b32.xlu0 %v313, 16
        %v318 = vpop.permute.xlu0 %317
        %v319 = vsel %vm274, %v318, %v313
        %320 = vrot.lane.b32.xlu0 %v316, 16
        %v321 = vpop.permute.xlu0 %320
        %322 = vrot.lane.b32.xlu0 %v319, 16
        %v323 = vpop.permute.xlu0 %322
        %v324 = vsel %vm274, %v321, %v312
        %v325 = vsel %vm274, %v323, %v313
        %328 = vrot.lane.b32.xlu0 %v324, 113
        %v329 = vpop.permute.xlu0 %328
        %330 = vrot.lane.b32.xlu0 %v325, 113
        %v331 = vpop.permute.xlu0 %330
        %v334 = vsub.f32 %v312, %v329
        %v335 = vsub.f32 %v313, %v331
        %v336 = vand.u32 2147483647, %v334
        %v337 = vand.u32 2147483647, %v335
        %v338 = vrot.slane %v312, 7
        %v339 = vrot.slane %v313, 7
        %v340 = vsel %vm305, %v338, %v339
        %v341 = vsel %vm305, %v339, %v338
        %v342 = vsub.f32 %v312, %v341
        %v343 = vsub.f32 %v313, %v340
        %v344 = vand.u32 2147483647, %v342
        %v345 = vand.u32 2147483647, %v343
        %s346 = scalar_lea.vmem %s221, 16 [#allocation6]
        %v347 = vld [vmem:[%s346] sm:$0xff]
        %v348 = vld [vmem:[%s346 + $0x8] sm:$0xff]
        %349 = vrot.lane.b32.xlu0 %v347, 16
        %v350 = vpop.permute.xlu0 %349
        %v351 = vsel %vm274, %v350, %v347
        %352 = vrot.lane.b32.xlu0 %v348, 16
        %v353 = vpop.permute.xlu0 %352
        %v354 = vsel %vm274, %v353, %v348
        %355 = vrot.lane.b32.xlu0 %v351, 16
        %v356 = vpop.permute.xlu0 %355
        %357 = vrot.lane.b32.xlu0 %v354, 16
        %v358 = vpop.permute.xlu0 %357
        %v359 = vsel %vm274, %v356, %v347
        %v360 = vsel %vm274, %v358, %v348
        %363 = vrot.lane.b32.xlu0 %v359, 113
        %v364 = vpop.permute.xlu0 %363
        %365 = vrot.lane.b32.xlu0 %v360, 113
        %v366 = vpop.permute.xlu0 %365
        %v369 = vsub.f32 %v347, %v364
        %v370 = vsub.f32 %v348, %v366
        %v371 = vand.u32 2147483647, %v369
        %v372 = vand.u32 2147483647, %v370
        %v373 = vrot.slane %v347, 7
        %v374 = vrot.slane %v348, 7
        %v375 = vsel %vm305, %v373, %v374
        %v376 = vsel %vm305, %v374, %v373
        %v377 = vsub.f32 %v347, %v376
        %v378 = vsub.f32 %v348, %v375
        %v379 = vand.u32 2147483647, %v377
        %v380 = vand.u32 2147483647, %v378
        %v381 = vadd.f32 %v336, %v371
        %v382 = vadd.f32 %v337, %v372
        %v383 = vadd.f32 %v344, %v379
        %v384 = vadd.f32 %v345, %v380
        %s385 = scalar_lea.vmem %s221, 32 [#allocation6]
        %v386 = vld [vmem:[%s385] sm:$0xff]
        %v387 = vld [vmem:[%s385 + $0x8] sm:$0xff]
        %388 = vrot.lane.b32.xlu0 %v386, 16
        %v389 = vpop.permute.xlu0 %388
        %v390 = vsel %vm274, %v389, %v386
        %391 = vrot.lane.b32.xlu0 %v387, 16
        %v392 = vpop.permute.xlu0 %391
        %v393 = vsel %vm274, %v392, %v387
        %394 = vrot.lane.b32.xlu0 %v390, 16
        %v395 = vpop.permute.xlu0 %394
        %396 = vrot.lane.b32.xlu0 %v393, 16
        %v397 = vpop.permute.xlu0 %396
        %v398 = vsel %vm274, %v395, %v386
        %v399 = vsel %vm274, %v397, %v387
        %402 = vrot.lane.b32.xlu0 %v398, 113
        %v403 = vpop.permute.xlu0 %402
        %404 = vrot.lane.b32.xlu0 %v399, 113
        %v405 = vpop.permute.xlu0 %404
        %v408 = vsub.f32 %v386, %v403
        %v409 = vsub.f32 %v387, %v405
        %v410 = vand.u32 2147483647, %v408
        %v411 = vand.u32 2147483647, %v409
        %v412 = vrot.slane %v386, 7
        %v413 = vrot.slane %v387, 7
        %v414 = vsel %vm305, %v412, %v413
        %v415 = vsel %vm305, %v413, %v412
        %v416 = vsub.f32 %v386, %v415
        %v417 = vsub.f32 %v387, %v414
        %v418 = vand.u32 2147483647, %v416
        %v419 = vand.u32 2147483647, %v417
        %v420 = vadd.f32 %v381, %v410
        %v421 = vadd.f32 %v382, %v411
        %v422 = vadd.f32 %v383, %v418
        %v423 = vadd.f32 %v384, %v419
        %v424 = vld [vmem:[%s257] sm:$0xff]
        %v425 = vmul.f32 %v420, -3.3333333
        %v426 = vmul.f32 %v421, -3.3333333
        %v427 = vmul.f32 %v425, 1.442695
        %v428 = vpow.pop %v427
        %v429 = vmul.f32 %v426, 1.442695
        %v430 = vpow.pop %v429
        %v431 = vmul.f32 %v299, %v428
        %v432 = vmul.f32 %v300, %v430
        %v433 = vadd.f32 %v431, %v432
        %v434 = vadd.f32 %v424, %v433
        %vm435 = vcmask 130048
        %436 = vst.msk [vmem:[%s257] sm:$0xff] %vm435, %v434
        %v437 = vld [vmem:[%s261] sm:$0xff]
        %v438 = vmul.f32 %v422, -3.3333333
        %v439 = vmul.f32 %v423, -3.3333333
        %v440 = vmul.f32 %v438, 1.442695
        %v441 = vpow.pop %v440
        %v442 = vmul.f32 %v439, 1.442695
        %v443 = vpow.pop %v442
        %v444 = vmul.f32 %v310, %v441
        %v445 = vmul.f32 %v311, %v443
        %vm446 = vcmp.eq.s32.totalorder %v304, 0
        %v447 = vsel %vm446, 0.0, %v444
        %v448 = vadd.f32 %v447, %v445
        %v449 = vadd.f32 %v437, %v448
        %450 = vst.msk [vmem:[%s261] sm:$0xff] %vm435, %v449
        %p451 = scmp.lt.s32.totalorder %s25, 1
        %s452 = scalar_select %p451, %s25, 1
        %s453 = smul.addr %s452, 8
        %s454 = scalar_lea.vmem %s2, %s453
        %p455 = scmp.lt.s32.totalorder %s25, 1
        %s456 = scalar_select %p455, %s25, 1
        %s457 = smul.addr %s456, 8
        %s458 = scalar_lea.vmem %s3, %s457
        // Predicated region
        $region41: #{disparity_smoothness.1} parent=27 // pred_check
          %p459 = pneg %p107
        $region42: #{disparity_smoothness.1} parent=27 // pred_check_branch
          %461 = sbr.rel (%p459) target = $region44
        $region43: #{disparity_smoothness.1} parent=27 // pred_region
          _
        $region44: #{disparity_smoothness.1} parent=27 // pred_fallthru
          _
        // Predicated region
        $region45: #{disparity_smoothness.1} parent=27 // pred_check
          %p462 = pneg %p133
        $region46: #{disparity_smoothness.1} parent=27 // pred_check_branch
          %464 = sbr.rel (%p462) target = $region48
        $region47: #{disparity_smoothness.1} parent=27 // pred_region
          _
        $region48: #{disparity_smoothness.1} parent=27 // pred_fallthru
          _
      $region28: #{disparity_smoothness.1} parent=5 // pred_fallthru
        _
      %p465 = scmp.le.s32.totalorder 2, %s16
      // Predicated region
      $region49: #{disparity_smoothness.1} parent=5 // pred_check
        %p466 = pneg %p465
      $region50: #{disparity_smoothness.1} parent=5 // pred_check_branch
        %468 = sbr.rel (%p466) target = $region52
      $region51: #{disparity_smoothness.1} parent=5 // pred_region
        %s469 = ssub.s32 %s16, 2
        // Predicated region
        $region53: #{disparity_smoothness.1} parent=51 // pred_check
          %p470 = pneg %p113
        $region54: #{disparity_smoothness.1} parent=51 // pred_check_branch
          %472 = sbr.rel (%p470) target = $region56
        $region55: #{disparity_smoothness.1} parent=51 // pred_region
          %p473 = scmp.lt.s32.totalorder %s27, 1
          %s474 = scalar_select %p473, %s27, 1
          %s475 = smul.addr %s474, 8
          %s476 = scalar_lea.vmem %s2, %s475
        $region56: #{disparity_smoothness.1} parent=51 // pred_fallthru
          _
        // Predicated region
        $region57: #{disparity_smoothness.1} parent=51 // pred_check
          %p477 = pneg %p139
        $region58: #{disparity_smoothness.1} parent=51 // pred_check_branch
          %479 = sbr.rel (%p477) target = $region60
        $region59: #{disparity_smoothness.1} parent=51 // pred_region
          %p480 = scmp.lt.s32.totalorder %s27, 1
          %s481 = scalar_select %p480, %s27, 1
          %s482 = smul.addr %s481, 8
          %s483 = scalar_lea.vmem %s3, %s482
        $region60: #{disparity_smoothness.1} parent=51 // pred_fallthru
          _
      $region52: #{disparity_smoothness.1} parent=5 // pred_fallthru
        _
    $region6: #{disparity_smoothness.1} parent=1 // loop_footer
      %s20 = sadd.s32 1, %s16
    $region7: #{disparity_smoothness.1} parent=1 // loop_footer_branch
      %15 = sbr.rel target = $region3
    $region8: #{disparity_smoothness.1} parent=1 // loop_exit
      _
    %484 = vsyncpa [#allocation5], 1
    %s485 = scalar_lea.sflag [#allocation5], 1
    %486 = vsyncpa %s485, 1
    %487 = vsyncpa [#allocation7], 1
    %s488 = scalar_lea.sflag [#allocation7], 1
    %489 = vsyncpa %s488, 1

</llo_original>
